<compile_context>
chip_gen: v5e
topology: v5e:2x2
jax: 0.10.0
libtpu: 0.0.40
codegen_flags: <defaults>
</compile_context>

<pallas_src>
import math
import functools

import jax
import jax.numpy as jnp
from jax.experimental import pallas as pl
from jax.experimental.pallas import tpu as pltpu


_LANE = 128


def _round_up(x, m):
    return ((x + m - 1) // m) * m


def _sublane(dtype):
    # Sub-32-bit dtypes pack along sublanes: 8 rows (f32), 16 (bf16), 32 (int8).
    return max(8, 32 // jnp.dtype(dtype).itemsize)


def _same_pad_amounts(height, width, kernel_size, stride):
    """Exactly reproduces Padding2D's pad math (extra pad goes to top/left)."""
    kh, kw = kernel_size
    sh, sw = stride
    out_h = math.ceil(height / sh)
    out_w = math.ceil(width / sw)
    wanted_h = (out_h - 1) * sh + kh
    wanted_w = (out_w - 1) * sw + kw
    pad_h = wanted_h - height
    pad_w = wanted_w - width
    pad_top = pad_h // 2 + pad_h % 2
    pad_down = pad_h - pad_top
    pad_left = pad_w // 2 + pad_w % 2
    pad_right = pad_w - pad_left
    return pad_top, pad_down, pad_left, pad_right


def _vmem_budgets():
    """Generation-aware (block_budget, vmem_limit, want_many_steps, vmem_cap)."""
    vmem_cap = 64 * 1024 * 1024
    try:
        vmem_cap = int(getattr(pltpu.get_tpu_info(), "vmem_capacity_bytes", vmem_cap))
    except Exception:
        pass
    if vmem_cap <= 64 * 1024 * 1024:
        # v7x-like: 64 MiB VMEM, 2 TensorCores -> leave headroom and keep enough
        # grid steps for the 'parallel' axis to shard across both cores.
        return 40 * 1024 * 1024, 48 * 1024 * 1024, True, vmem_cap
    # v5e / v6e: 128 MiB VMEM, single TensorCore -> biggest blocks win.
    return 80 * 1024 * 1024, 100 * 1024 * 1024, False, vmem_cap


def _pad_kernel_flat(x_ref, o_ref, *, h, w, w_out, pad_top, pad_left, pad_w):
    # x_ref: (B, h*w), o_ref: (B, h_out*w_out); both lane-dense in VMEM.
    # Zero-fill the output tile (dense stores), then copy each input row into its
    # interior window.  The row loop is unrolled at trace time (static offsets).
    o_ref[...] = jnp.zeros_like(o_ref)
    base = pad_top * w_out + pad_left
    if pad_w == 0:
        # No W padding: the interior is one contiguous lane range.
        o_ref[:, base:base + h * w] = x_ref[...]
    else:
        for i in range(h):
            start = base + i * w_out
            o_ref[:, start:start + w] = x_ref[:, i * w:(i + 1) * w]


def _pad_kernel_3d(x_ref, o_ref, *, pad_top, pad_left):
    # Lane-aligned W / W_out: the plain 3-D layout is already dense.
    _, h, w = x_ref.shape
    o_ref[...] = jnp.zeros_like(o_ref)
    o_ref[:, pad_top:pad_top + h, pad_left:pad_left + w] = x_ref[...]


def padding2d(inputs, kernel_size, stride, padding="SAME", *, block_planes=None):
    """Pallas TPU implementation of Padding2D.forward (NCHW input)."""
    if isinstance(stride, int):
        stride = (stride, stride)
    if isinstance(kernel_size, int):
        kernel_size = (kernel_size, kernel_size)
    if padding not in ("SAME", "VALID"):
        raise ValueError("padding must be 'SAME' or 'VALID'")
    if padding == "VALID":
        return inputs

    n, c, h, w = inputs.shape
    pad_top, pad_down, pad_left, pad_right = _same_pad_amounts(
        h, w, kernel_size, stride)

    if min(pad_top, pad_down, pad_left, pad_right) < 0:
        # TODO(synk): kernel_size < stride makes F.pad crop (negative pad); unsupported.
        raise NotImplementedError(
            "negative SAME padding (kernel_size < stride) is not supported")
    if (pad_top | pad_down | pad_left | pad_right) == 0:
        return inputs

    h_out = h + pad_top + pad_down
    w_out = w + pad_left + pad_right
    nc = n * c
    dtype = inputs.dtype
    itemsize = jnp.dtype(dtype).itemsize
    sub = _sublane(dtype)

    block_budget, vmem_limit, want_many_steps, vmem_cap = _vmem_budgets()

    # Lane-dense flattened layout unless (H, W) planes are already lane-aligned
    # (or H is too tall to unroll the per-row interior stores).
    use_flat = ((w % _LANE != 0) or (w_out % _LANE != 0)) and h <= 512
    # TODO(synk): add an H-tiling grid axis (pl.when on first/last tile) for planes
    # too large to fit a single VMEM block, instead of one huge block per plane.

    if use_flat:
        in_l = _round_up(h * w, _LANE)
        out_l = _round_up(h_out * w_out, _LANE)
        # Padded VMEM bytes for `sub` planes, double-buffered in + out.
        per_group = 2 * (in_l + out_l) * sub * itemsize
        block_b = min(nc, max(1, block_budget // per_group) * sub)
    else:
        in_p = _round_up(h, sub) * _round_up(w, _LANE) * itemsize
        out_p = _round_up(h_out, sub) * _round_up(w_out, _LANE) * itemsize
        # 2x double-buffering of in+out, +1 input tile for the in-register load.
        per_plane = 2 * (in_p + out_p) + in_p
        block_b = min(nc, max(1, block_budget // per_plane))

    if want_many_steps and nc >= 8:
        # v7x-like: >= 8 grid steps so each of the 2 TensorCores pipelines >= 4.
        block_b = min(block_b, pl.cdiv(nc, 8))
    if block_planes is not None:
        block_b = min(block_b, int(block_planes))
    block_b = max(1, int(block_b))
    if use_flat and block_b < nc:
        # 2-D blocks: second-to-last block dim must be a multiple of the sublane
        # count (or cover the whole axis).
        block_b = min(nc, max(sub, (block_b // sub) * sub))
    block_b = int(block_b)
    grid = (pl.cdiv(nc, block_b),)

    # Ensure the scoped limit covers at least one double-buffered block (huge
    # single planes), but never exceed ~90% of physical VMEM.
    if use_flat:
        need = 2 * (in_l + out_l) * _round_up(block_b, sub) * itemsize
    else:
        need = block_b * per_plane
    vmem_limit = int(min(max(vmem_limit, need + (4 << 20)), int(vmem_cap * 0.9)))

    compiler_params = pltpu.CompilerParams(
        dimension_semantics=("parallel",),
        vmem_limit_bytes=vmem_limit,
    )
    cost = pl.CostEstimate(
        flops=0, transcendentals=0,
        bytes_accessed=nc * (h * w + h_out * w_out) * itemsize)

    if use_flat:
        kernel = functools.partial(
            _pad_kernel_flat, h=h, w=w, w_out=w_out,
            pad_top=pad_top, pad_left=pad_left, pad_w=pad_left + pad_right)
        out = pl.pallas_call(
            kernel,
            out_shape=jax.ShapeDtypeStruct((nc, h_out * w_out), dtype),
            grid=grid,
            in_specs=[pl.BlockSpec((block_b, h * w), lambda i: (i, 0))],
            out_specs=pl.BlockSpec((block_b, h_out * w_out), lambda i: (i, 0)),
            compiler_params=compiler_params,
            cost_estimate=cost,
        )(inputs.reshape(nc, h * w))
    else:
        kernel = functools.partial(
            _pad_kernel_3d, pad_top=pad_top, pad_left=pad_left)
        out = pl.pallas_call(
            kernel,
            out_shape=jax.ShapeDtypeStruct((nc, h_out, w_out), dtype),
            grid=grid,
            in_specs=[pl.BlockSpec((block_b, h, w), lambda i: (i, 0, 0))],
            out_specs=pl.BlockSpec((block_b, h_out, w_out), lambda i: (i, 0, 0)),
            compiler_params=compiler_params,
            cost_estimate=cost,
        )(inputs.reshape(nc, h, w))

    return out.reshape(n, c, h_out, w_out)


if __name__ == "__main__":
    key = jax.random.PRNGKey(0)

    # Case 1: the module's canonical small shape (N=2, C=4, 16x16, k=3, s=2).
    N, C, H, W = 2, 4, 16, 16
    ksize, strd = 3, 2
    x = jax.random.normal(key, (N, C, H, W), dtype=jnp.float32)
    out = jax.block_until_ready(
        padding2d(x, kernel_size=ksize, stride=strd, padding="SAME"))
    pt, pd, plft, prt = _same_pad_amounts(H, W, (ksize, ksize), (strd, strd))
    ref = jnp.pad(x, ((0, 0), (0, 0), (pt, pd), (plft, prt)))
    assert out.shape == ref.shape, (out.shape, ref.shape)
    assert jnp.allclose(out, ref), "mismatch vs reference padding (case 1)"

    # VALID is a pass-through, as in the PyTorch module.
    out_valid = padding2d(x, kernel_size=ksize, stride=strd, padding="VALID")
    assert out_valid.shape == x.shape and jnp.allclose(out_valid, x)

    # Case 2: non-divisible N*C / block, odd spatial dims, pads on all four sides
    # (stride 1), forced small block so the last grid step is a masked partial block.
    N2, C2, H2, W2 = 3, 5, 10, 13
    x2 = jax.random.normal(jax.random.PRNGKey(0), (N2, C2, H2, W2), dtype=jnp.float32)
    out2 = jax.block_until_ready(
        padding2d(x2, kernel_size=3, stride=1, padding="SAME", block_planes=8))
    pt2, pd2, plf2, prt2 = _same_pad_amounts(H2, W2, (3, 3), (1, 1))
    ref2 = jnp.pad(x2, ((0, 0), (0, 0), (pt2, pd2), (plf2, prt2)))
    assert out2.shape == ref2.shape, (out2.shape, ref2.shape)
    assert jnp.allclose(out2, ref2), "mismatch vs reference padding (case 2)"

    print("KERNEL_OK")
</pallas_src>

<mosaic_0001>
module attributes {stable_mosaic.version = 11 : i64} {
  func.func @_pad_kernel_flat(%arg0: i32, %arg1: memref<8x256xf32, #tpu.memory_space<vmem>>, %arg2: memref<8x289xf32, #tpu.memory_space<vmem>>) attributes {dimension_semantics = [#tpu.dimension_semantics<parallel>], iteration_bounds = array<i64: 1>, scalar_prefetch = 0 : i64, scratch_operands = 0 : i64, tpu.core_type = #tpu.core_type<tc>, window_params = [{transform_indices = @transform_0, window_bounds = array<i64: 8, 256>}, {transform_indices = @transform_1, window_bounds = array<i64: 8, 289>}]} {
    %cst = arith.constant 0.000000e+00 : f32
    %0 = vector.broadcast %cst : f32 to vector<8x289xf32>
    %c0 = arith.constant 0 : index
    %c0_0 = arith.constant 0 : index
    %1 = vector.load %arg2[%c0, %c0_0] : memref<8x289xf32, #tpu.memory_space<vmem>>, vector<8x289xf32>
    tpu.vector_store %arg2[%c0, %c0_0], %0 {strides = array<i32>} : memref<8x289xf32, #tpu.memory_space<vmem>>, vector<8x289xf32>,
    %c0_1 = arith.constant 0 : index
    %c0_2 = arith.constant 0 : index
    %2 = vector.load %arg1[%c0_1, %c0_2] : memref<8x256xf32, #tpu.memory_space<vmem>>, vector<8x16xf32>
    %c0_3 = arith.constant 0 : index
    %c18 = arith.constant 18 : index
    %3 = vector.load %arg2[%c0_3, %c18] : memref<8x289xf32, #tpu.memory_space<vmem>>, vector<8x16xf32>
    tpu.vector_store %arg2[%c0_3, %c18], %2 {strides = array<i32>} : memref<8x289xf32, #tpu.memory_space<vmem>>, vector<8x16xf32>,
    %c0_4 = arith.constant 0 : index
    %c16 = arith.constant 16 : index
    %4 = vector.load %arg1[%c0_4, %c16] : memref<8x256xf32, #tpu.memory_space<vmem>>, vector<8x16xf32>
    %c0_5 = arith.constant 0 : index
    %c35 = arith.constant 35 : index
    %5 = vector.load %arg2[%c0_5, %c35] : memref<8x289xf32, #tpu.memory_space<vmem>>, vector<8x16xf32>
    tpu.vector_store %arg2[%c0_5, %c35], %4 {strides = array<i32>} : memref<8x289xf32, #tpu.memory_space<vmem>>, vector<8x16xf32>,
    %c0_6 = arith.constant 0 : index
    %c32 = arith.constant 32 : index
    %6 = vector.load %arg1[%c0_6, %c32] : memref<8x256xf32, #tpu.memory_space<vmem>>, vector<8x16xf32>
    %c0_7 = arith.constant 0 : index
    %c52 = arith.constant 52 : index
    %7 = vector.load %arg2[%c0_7, %c52] : memref<8x289xf32, #tpu.memory_space<vmem>>, vector<8x16xf32>
    tpu.vector_store %arg2[%c0_7, %c52], %6 {strides = array<i32>} : memref<8x289xf32, #tpu.memory_space<vmem>>, vector<8x16xf32>,
    %c0_8 = arith.constant 0 : index
    %c48 = arith.constant 48 : index
    %8 = vector.load %arg1[%c0_8, %c48] : memref<8x256xf32, #tpu.memory_space<vmem>>, vector<8x16xf32>
    %c0_9 = arith.constant 0 : index
    %c69 = arith.constant 69 : index
    %9 = vector.load %arg2[%c0_9, %c69] : memref<8x289xf32, #tpu.memory_space<vmem>>, vector<8x16xf32>
    tpu.vector_store %arg2[%c0_9, %c69], %8 {strides = array<i32>} : memref<8x289xf32, #tpu.memory_space<vmem>>, vector<8x16xf32>,
    %c0_10 = arith.constant 0 : index
    %c64 = arith.constant 64 : index
    %10 = vector.load %arg1[%c0_10, %c64] : memref<8x256xf32, #tpu.memory_space<vmem>>, vector<8x16xf32>
    %c0_11 = arith.constant 0 : index
    %c86 = arith.constant 86 : index
    %11 = vector.load %arg2[%c0_11, %c86] : memref<8x289xf32, #tpu.memory_space<vmem>>, vector<8x16xf32>
    tpu.vector_store %arg2[%c0_11, %c86], %10 {strides = array<i32>} : memref<8x289xf32, #tpu.memory_space<vmem>>, vector<8x16xf32>,
    %c0_12 = arith.constant 0 : index
    %c80 = arith.constant 80 : index
    %12 = vector.load %arg1[%c0_12, %c80] : memref<8x256xf32, #tpu.memory_space<vmem>>, vector<8x16xf32>
    %c0_13 = arith.constant 0 : index
    %c103 = arith.constant 103 : index
    %13 = vector.load %arg2[%c0_13, %c103] : memref<8x289xf32, #tpu.memory_space<vmem>>, vector<8x16xf32>
    tpu.vector_store %arg2[%c0_13, %c103], %12 {strides = array<i32>} : memref<8x289xf32, #tpu.memory_space<vmem>>, vector<8x16xf32>,
    %c0_14 = arith.constant 0 : index
    %c96 = arith.constant 96 : index
    %14 = vector.load %arg1[%c0_14, %c96] : memref<8x256xf32, #tpu.memory_space<vmem>>, vector<8x16xf32>
    %c0_15 = arith.constant 0 : index
    %c120 = arith.constant 120 : index
    %15 = vector.load %arg2[%c0_15, %c120] : memref<8x289xf32, #tpu.memory_space<vmem>>, vector<8x16xf32>
    tpu.vector_store %arg2[%c0_15, %c120], %14 {strides = array<i32>} : memref<8x289xf32, #tpu.memory_space<vmem>>, vector<8x16xf32>,
    %c0_16 = arith.constant 0 : index
    %c112 = arith.constant 112 : index
    %16 = vector.load %arg1[%c0_16, %c112] : memref<8x256xf32, #tpu.memory_space<vmem>>, vector<8x16xf32>
    %c0_17 = arith.constant 0 : index
    %c137 = arith.constant 137 : index
    %17 = vector.load %arg2[%c0_17, %c137] : memref<8x289xf32, #tpu.memory_space<vmem>>, vector<8x16xf32>
    tpu.vector_store %arg2[%c0_17, %c137], %16 {strides = array<i32>} : memref<8x289xf32, #tpu.memory_space<vmem>>, vector<8x16xf32>,
    %c0_18 = arith.constant 0 : index
    %c128 = arith.constant 128 : index
    %18 = vector.load %arg1[%c0_18, %c128] : memref<8x256xf32, #tpu.memory_space<vmem>>, vector<8x16xf32>
    %c0_19 = arith.constant 0 : index
    %c154 = arith.constant 154 : index
    %19 = vector.load %arg2[%c0_19, %c154] : memref<8x289xf32, #tpu.memory_space<vmem>>, vector<8x16xf32>
    tpu.vector_store %arg2[%c0_19, %c154], %18 {strides = array<i32>} : memref<8x289xf32, #tpu.memory_space<vmem>>, vector<8x16xf32>,
    %c0_20 = arith.constant 0 : index
    %c144 = arith.constant 144 : index
    %20 = vector.load %arg1[%c0_20, %c144] : memref<8x256xf32, #tpu.memory_space<vmem>>, vector<8x16xf32>
    %c0_21 = arith.constant 0 : index
    %c171 = arith.constant 171 : index
    %21 = vector.load %arg2[%c0_21, %c171] : memref<8x289xf32, #tpu.memory_space<vmem>>, vector<8x16xf32>
    tpu.vector_store %arg2[%c0_21, %c171], %20 {strides = array<i32>} : memref<8x289xf32, #tpu.memory_space<vmem>>, vector<8x16xf32>,
    %c0_22 = arith.constant 0 : index
    %c160 = arith.constant 160 : index
    %22 = vector.load %arg1[%c0_22, %c160] : memref<8x256xf32, #tpu.memory_space<vmem>>, vector<8x16xf32>
    %c0_23 = arith.constant 0 : index
    %c188 = arith.constant 188 : index
    %23 = vector.load %arg2[%c0_23, %c188] : memref<8x289xf32, #tpu.memory_space<vmem>>, vector<8x16xf32>
    tpu.vector_store %arg2[%c0_23, %c188], %22 {strides = array<i32>} : memref<8x289xf32, #tpu.memory_space<vmem>>, vector<8x16xf32>,
    %c0_24 = arith.constant 0 : index
    %c176 = arith.constant 176 : index
    %24 = vector.load %arg1[%c0_24, %c176] : memref<8x256xf32, #tpu.memory_space<vmem>>, vector<8x16xf32>
    %c0_25 = arith.constant 0 : index
    %c205 = arith.constant 205 : index
    %25 = vector.load %arg2[%c0_25, %c205] : memref<8x289xf32, #tpu.memory_space<vmem>>, vector<8x16xf32>
    tpu.vector_store %arg2[%c0_25, %c205], %24 {strides = array<i32>} : memref<8x289xf32, #tpu.memory_space<vmem>>, vector<8x16xf32>,
    %c0_26 = arith.constant 0 : index
    %c192 = arith.constant 192 : index
    %26 = vector.load %arg1[%c0_26, %c192] : memref<8x256xf32, #tpu.memory_space<vmem>>, vector<8x16xf32>
    %c0_27 = arith.constant 0 : index
    %c222 = arith.constant 222 : index
    %27 = vector.load %arg2[%c0_27, %c222] : memref<8x289xf32, #tpu.memory_space<vmem>>, vector<8x16xf32>
    tpu.vector_store %arg2[%c0_27, %c222], %26 {strides = array<i32>} : memref<8x289xf32, #tpu.memory_space<vmem>>, vector<8x16xf32>,
    %c0_28 = arith.constant 0 : index
    %c208 = arith.constant 208 : index
    %28 = vector.load %arg1[%c0_28, %c208] : memref<8x256xf32, #tpu.memory_space<vmem>>, vector<8x16xf32>
    %c0_29 = arith.constant 0 : index
    %c239 = arith.constant 239 : index
    %29 = vector.load %arg2[%c0_29, %c239] : memref<8x289xf32, #tpu.memory_space<vmem>>, vector<8x16xf32>
    tpu.vector_store %arg2[%c0_29, %c239], %28 {strides = array<i32>} : memref<8x289xf32, #tpu.memory_space<vmem>>, vector<8x16xf32>,
    %c0_30 = arith.constant 0 : index
    %c224 = arith.constant 224 : index
    %30 = vector.load %arg1[%c0_30, %c224] : memref<8x256xf32, #tpu.memory_space<vmem>>, vector<8x16xf32>
    %c0_31 = arith.constant 0 : index
    %c256 = arith.constant 256 : index
    %31 = vector.load %arg2[%c0_31, %c256] : memref<8x289xf32, #tpu.memory_space<vmem>>, vector<8x16xf32>
    tpu.vector_store %arg2[%c0_31, %c256], %30 {strides = array<i32>} : memref<8x289xf32, #tpu.memory_space<vmem>>, vector<8x16xf32>,
    %c0_32 = arith.constant 0 : index
    %c240 = arith.constant 240 : index
    %32 = vector.load %arg1[%c0_32, %c240] : memref<8x256xf32, #tpu.memory_space<vmem>>, vector<8x16xf32>
    %c0_33 = arith.constant 0 : index
    %c273 = arith.constant 273 : index
    %33 = vector.load %arg2[%c0_33, %c273] : memref<8x289xf32, #tpu.memory_space<vmem>>, vector<8x16xf32>
    tpu.vector_store %arg2[%c0_33, %c273], %32 {strides = array<i32>} : memref<8x289xf32, #tpu.memory_space<vmem>>, vector<8x16xf32>,
    return
  }
  func.func @transform_0(%arg0: i32) -> (i32, i32) {
    %c0_i32 = arith.constant 0 : i32
    %c0_i32_0 = arith.constant 0 : i32
    return %arg0, %c0_i32 : i32, i32
  }
  func.func @transform_1(%arg0: i32) -> (i32, i32) {
    %c0_i32 = arith.constant 0 : i32
    %c0_i32_0 = arith.constant 0 : i32
    return %arg0, %c0_i32 : i32, i32
  }
}

</mosaic_0001>

<llo_original>
// kernel: tpu_custom_call.1
$region0: #{tpu_custom_call.1}
  #allocation0 [shape = 'u32[]', space=smem, size = 0x4, offset = 0x4, fixed_abs, tag = 'smem constant byte address 0x4 - core index']
  #allocation1 [shape = 'u32[72,128]{1,0:T(1,128)}', space=vmem, size = 0x9000, scoped, tag = 'internal scratch']
  %s0 = inlined_call_operand.hbm [shape: f32[8,256], index: 0, kind: input, shape index: {}]
  %s1 = inlined_call_operand.hbm [shape: f32[8,289], index: 1, kind: output, shape index: {}]
  %s2 = sld [smem:[#allocation0]]
  $region18: #{tpu_custom_call.1} parent=0
    _
  %s4 = ssub.s32 1, %s2
  %s5 = scalar_select 0, %s4, %s2
  $region1: #{tpu_custom_call.1} parent=0
    #allocation2 [shape = 'u8[8192]{0}', space=vmem, size = 0x2000, scoped, tag = 'input window, operand 0, single buffered']
    #allocation3 [shape = 's32[1]{0}', space=sflag, size = 0x4, scoped, tag = 'scoped memory for tpu_custom_call.1']
    #allocation4 [shape = 's32[1]{0}', space=sflag, size = 0x4, scoped, tag = 'scoped memory for tpu_custom_call.1']
    #allocation5 [shape = 'u8[12288]{0}', space=vmem, size = 0x3000, scoped, tag = 'output window, operand 0, single buffered']
    %6 = vsyncpa [#allocation3], 0
    %7 = vsyncpa [#allocation4], 0
    // Predicated region
    $region2: #{tpu_custom_call.1} parent=1 // pred_check
      _
    $region3: #{tpu_custom_call.1} parent=1 // pred_check_branch
      %9 = sbr.rel (0) target = $region5
    $region4: #{tpu_custom_call.1} parent=1 // pred_region
      %11 = vsyncadd [#allocation3], 0
      %s13 = sshll.u32 %s0, 4
      %s14 = int_to_ptr.hbm [resolvable:$true] %s13
      %s15 = sshll.u32 [#allocation2], 4
      %s16 = int_to_ptr.vmem [resolvable:$true] %s15
      %18 = dma.hbm_to_vmem [thread:$0]  %s14, 256, %s16, [#allocation3]
    $region5: #{tpu_custom_call.1} parent=1 // pred_fallthru
      _
    // Predicated region
    $region6: #{tpu_custom_call.1} parent=1 // pred_check
      _
    $region7: #{tpu_custom_call.1} parent=1 // pred_check_branch
      %20 = sbr.rel (0) target = $region9
    $region8: #{tpu_custom_call.1} parent=1 // pred_region
      %22 = dma.done [#allocation3], 256
    $region9: #{tpu_custom_call.1} parent=1 // pred_fallthru
      _
    %23 = vst [vmem:[#allocation5] sm:$0xff] 0.0
    %24 = vst [vmem:[#allocation5 + $0x8] sm:$0xff] 0.0
    %vm25 = vcmask 269312
    %26 = vst.msk [vmem:[#allocation5 + $0x10] sm:$0xff] %vm25, 0.0
    %v27 = vld [vmem:[#allocation2] sm:$0xff]
    %29 = vrot.lane.b32.xlu0 %v27, 18
    %v30 = vpop.permute.xlu0 %29
    %vm32 = vcmask 277648
    %33 = vst.msk [vmem:[#allocation5] sm:$0xff] %vm32, %v30
    %v34 = vld [vmem:[#allocation2] sm:$0xff]
    %36 = vrot.lane.b32.xlu0 %v34, 19
    %v37 = vpop.permute.xlu0 %36
    %vm39 = vcmask 417048
    %40 = vst.msk [vmem:[#allocation5] sm:$0xff] %vm39, %v37
    %v41 = vld [vmem:[#allocation2] sm:$0xff]
    %43 = vrot.lane.b32.xlu0 %v41, 20
    %v44 = vpop.permute.xlu0 %43
    %vm46 = vcmask 556448
    %47 = vst.msk [vmem:[#allocation5] sm:$0xff] %vm46, %v44
    %v48 = vld [vmem:[#allocation2] sm:$0xff]
    %50 = vrot.lane.b32.xlu0 %v48, 21
    %v51 = vpop.permute.xlu0 %50
    %vm53 = vcmask 695848
    %54 = vst.msk [vmem:[#allocation5] sm:$0xff] %vm53, %v51
    %v55 = vld [vmem:[#allocation2] sm:$0xff]
    %57 = vrot.lane.b32.xlu0 %v55, 22
    %v58 = vpop.permute.xlu0 %57
    %vm60 = vcmask 835248
    %61 = vst.msk [vmem:[#allocation5] sm:$0xff] %vm60, %v58
    %v62 = vld [vmem:[#allocation2] sm:$0xff]
    %64 = vrot.lane.b32.xlu0 %v62, 23
    %v65 = vpop.permute.xlu0 %64
    %vm67 = vcmask 974648
    %68 = vst.msk [vmem:[#allocation5] sm:$0xff] %vm67, %v65
    %v69 = vld [vmem:[#allocation2] sm:$0xff]
    %71 = vrot.lane.b32.xlu0 %v69, 24
    %v72 = vpop.permute.xlu0 %71
    %vm74 = vcmask 1048512
    %75 = vst.msk [vmem:[#allocation5] sm:$0xff] %vm74, %v72
    %vm76 = vcmask 64512
    %77 = vst.msk [vmem:[#allocation5 + $0x8] sm:$0xff] %vm76, %v72
    %v78 = vld [vmem:[#allocation2] sm:$0xff]
    %80 = vrot.lane.b32.xlu0 %v78, 25
    %v81 = vpop.permute.xlu0 %80
    %vm83 = vcmask 203848
    %84 = vst.msk [vmem:[#allocation5 + $0x8] sm:$0xff] %vm83, %v81
    %v85 = vld [vmem:[#allocation2 + $0x8] sm:$0xff]
    %87 = vrot.lane.b32.xlu0 %v85, 26
    %v88 = vpop.permute.xlu0 %87
    %vm90 = vcmask 343248
    %91 = vst.msk [vmem:[#allocation5 + $0x8] sm:$0xff] %vm90, %v88
    %v92 = vld [vmem:[#allocation2 + $0x8] sm:$0xff]
    %94 = vrot.lane.b32.xlu0 %v92, 27
    %v95 = vpop.permute.xlu0 %94
    %vm97 = vcmask 482648
    %98 = vst.msk [vmem:[#allocation5 + $0x8] sm:$0xff] %vm97, %v95
    %v99 = vld [vmem:[#allocation2 + $0x8] sm:$0xff]
    %101 = vrot.lane.b32.xlu0 %v99, 28
    %v102 = vpop.permute.xlu0 %101
    %vm104 = vcmask 622048
    %105 = vst.msk [vmem:[#allocation5 + $0x8] sm:$0xff] %vm104, %v102
    %v106 = vld [vmem:[#allocation2 + $0x8] sm:$0xff]
    %108 = vrot.lane.b32.xlu0 %v106, 29
    %v109 = vpop.permute.xlu0 %108
    %vm111 = vcmask 761448
    %112 = vst.msk [vmem:[#allocation5 + $0x8] sm:$0xff] %vm111, %v109
    %v113 = vld [vmem:[#allocation2 + $0x8] sm:$0xff]
    %115 = vrot.lane.b32.xlu0 %v113, 30
    %v116 = vpop.permute.xlu0 %115
    %vm118 = vcmask 900848
    %119 = vst.msk [vmem:[#allocation5 + $0x8] sm:$0xff] %vm118, %v116
    %v120 = vld [vmem:[#allocation2 + $0x8] sm:$0xff]
    %122 = vrot.lane.b32.xlu0 %v120, 31
    %v123 = vpop.permute.xlu0 %122
    %vm125 = vcmask 1040248
    %126 = vst.msk [vmem:[#allocation5 + $0x8] sm:$0xff] %vm125, %v123
    %v127 = vld [vmem:[#allocation2 + $0x8] sm:$0xff]
    %129 = vrot.lane.b32.xlu0 %v127, 32
    %v130 = vpop.permute.xlu0 %129
    %vm132 = vcmask 130048
    %133 = vst.msk [vmem:[#allocation5 + $0x10] sm:$0xff] %vm132, %v130
    %v134 = vld [vmem:[#allocation2 + $0x8] sm:$0xff]
    %136 = vrot.lane.b32.xlu0 %v134, 33
    %v137 = vpop.permute.xlu0 %136
    %vm139 = vcmask 269448
    %140 = vst.msk [vmem:[#allocation5 + $0x10] sm:$0xff] %vm139, %v137
    // Predicated region
    $region10: #{tpu_custom_call.1} parent=1 // pred_check
      _
    $region11: #{tpu_custom_call.1} parent=1 // pred_check_branch
      %142 = sbr.rel (0) target = $region13
    $region12: #{tpu_custom_call.1} parent=1 // pred_region
      %144 = vsyncadd [#allocation4], 0
      %s146 = sshll.u32 [#allocation5], 4
      %s147 = int_to_ptr.vmem [resolvable:$true] %s146
      %s148 = sshll.u32 %s1, 4
      %s149 = int_to_ptr.hbm [resolvable:$true] %s148
      %151 = dma.vmem_to_hbm [thread:$0]  %s147, 384, %s149, [#allocation4]
    $region13: #{tpu_custom_call.1} parent=1 // pred_fallthru
      _
    // Predicated region
    $region14: #{tpu_custom_call.1} parent=1 // pred_check
      _
    $region15: #{tpu_custom_call.1} parent=1 // pred_check_branch
      %153 = sbr.rel (0) target = $region17
    $region16: #{tpu_custom_call.1} parent=1 // pred_region
      %155 = dma.done [#allocation4], 384
    $region17: #{tpu_custom_call.1} parent=1 // pred_fallthru
      _
    %156 = vsyncpa [#allocation3], 1
    %157 = vsyncpa [#allocation4], 1

</llo_original>
